<compile_context>
chip_gen: v6e
topology: v6e:2x2x1
jax: 0.10.0
libtpu: 0.0.40
codegen_flags: <defaults>
</compile_context>

<pallas_src>
import math

import jax
import jax.numpy as jnp
from jax.experimental import pallas as pl
from jax.experimental.pallas import tpu as pltpu


def _get_emb(sin_inp: jax.Array) -> jax.Array:
    """interleave(sin, cos) along the last dim: (..., C//2) -> (..., C)."""
    emb = jnp.stack([jnp.sin(sin_inp), jnp.cos(sin_inp)], axis=-1)
    return emb.reshape(sin_inp.shape[:-1] + (2 * sin_inp.shape[-1],))


def _pe2d_flat_kernel(pos_x_ref, freq_ref, phase_ref, row_y_ref, out_ref):
    """Lane-dense path.

    pos_x_ref: (1, TH, 1) f32
    freq_ref / phase_ref: (1, 1, K) f32   (per-lane freq/phase; zeros on y-half lanes)
    row_y_ref: (1, 1, K) f32              (y-half row pattern; zeros on x-half lanes)
    out_ref:   (1, TH, K) out_dtype, K = W * 2C
    """
    px = pos_x_ref[0]                                   # (TH, 1) f32
    arg = px * freq_ref[0] + phase_ref[0]               # (TH, K)
    # x-half lanes: sin/cos(px * inv_freq); y-half lanes: sin(0) = 0, + row_y supplies them.
    out_ref[0] = (jnp.sin(arg) + row_y_ref[0]).astype(out_ref.dtype)


def _pe2d_wide_kernel(emb_x_ref, emb_y_ref, out_ref):
    """Wide path (2C % 128 == 0): single full-width store of broadcast-added halves.

    emb_x_ref: (1, TH, 2C) f32  (x-half values, zeros on channels [C:2C])
    emb_y_ref: (1, W,  2C) f32  (y-half values, zeros on channels [0:C])
    out_ref:   (1, TH, W, 2C) out_dtype
    """
    ex = emb_x_ref[0]                                   # (TH, 2C)
    ey = emb_y_ref[0]                                   # (W, 2C)
    out_ref[0] = (ex[:, None, :] + ey[None, :, :]).astype(out_ref.dtype)


def _choose_tile_rows(h: int, b: int, row_bytes: int, budget_bytes: int) -> int:
    """Largest multiple-of-8 TH (or TH == H) with 2*TH*row_bytes <= budget; ensure >=2 grid steps."""
    max_rows = max(8, (budget_bytes // max(1, 2 * row_bytes)) // 8 * 8)
    th = min(h, max_rows)                               # th == h (full dim) or a multiple of 8
    # Keep both v7x TensorCores fed: avoid a 1-step grid when the output can be split.
    if b * pl.cdiv(h, th) < 2 and h >= 16:
        th = max(8, (h // 2) // 8 * 8)
    return th


def positional_encoding_2d(coords: jax.Array, org_channels: int, *,
                           tile_rows: int | None = None,
                           vmem_block_budget_bytes: int = 8 * 1024 * 1024) -> jax.Array:
    """Pallas implementation of PositionalEncoding2D.forward.

    Note: the reference PyTorch module's broadcasting only works when H == W;
    rectangular inputs raise here as well.
    """
    if coords.ndim != 4:
        raise RuntimeError("The input tensor must be 4D!")
    B, num_coords, H, W = coords.shape
    if num_coords < 2:
        raise ValueError("coords must carry at least 2 coordinate channels")
    if H != W:
        raise ValueError("the reference implementation's broadcasting requires H == W")

    C = int(math.ceil(org_channels / 4) * 2)
    two_c = 2 * C
    out_dtype = coords.dtype
    itemsize = jnp.dtype(out_dtype).itemsize

    pos_x = coords[:, 0, 0, :].astype(jnp.float32)      # (B, W): indexed by h in the output
    pos_y = coords[:, 1, :, 0].astype(jnp.float32)      # (B, H): indexed by w in the output
    inv_freq = 1.0 / (10000.0 ** (jnp.arange(0, C, 2, dtype=jnp.float32) / C))   # (C//2,)

    row_bytes = W * two_c * itemsize
    if tile_rows is not None:
        th = int(tile_rows)
        if th != H and (th % 8 != 0 or th > H):
            raise ValueError(f"tile_rows={th} must be a multiple of 8 (<= H) or equal H={H}")
    else:
        th = _choose_tile_rows(H, B, row_bytes, vmem_block_budget_bytes)

    grid = (B, pl.cdiv(H, th))
    dims = ("parallel", "parallel")
    out_block_bytes = th * row_bytes
    compiler_params = pltpu.CompilerParams(
        dimension_semantics=dims,
        vmem_limit_bytes=int(min(2 * out_block_bytes + (8 << 20), 128 << 20)),
    )
    out_bytes = B * H * W * two_c * itemsize

    if two_c % 128 != 0:
        # ---- Lane-dense flattened path (covers all 2C not a multiple of 128). ----
        K = W * two_c
        # Per-lane frequency / phase for the x-half (zeros on y-half lanes -> sin(0)=0).
        freq_x = jnp.repeat(inv_freq, 2)                                        # (C,)
        phase_x = jnp.tile(jnp.array([0.0, math.pi / 2.0], jnp.float32), C // 2)  # (C,) 0/pi/2 -> sin/cos
        zeros_c = jnp.zeros((C,), jnp.float32)
        freq_lane = jnp.tile(jnp.concatenate([freq_x, zeros_c]), W).reshape(1, 1, K)
        phase_lane = jnp.tile(jnp.concatenate([phase_x, zeros_c]), W).reshape(1, 1, K)
        # h-independent y-half row pattern (tiny: B*K f32), zeros on the x-half lanes.
        emb_y = _get_emb(pos_y[:, :, None] * inv_freq[None, None, :])           # (B, W, C)
        row_y = jnp.concatenate([jnp.zeros((B, W, C), jnp.float32), emb_y],
                                axis=-1).reshape(B, 1, K)

        out_flat = pl.pallas_call(
            _pe2d_flat_kernel,
            out_shape=jax.ShapeDtypeStruct((B, H, K), out_dtype),
            grid_spec=pltpu.PrefetchScalarGridSpec(
                num_scalar_prefetch=0,
                grid=grid,
                in_specs=[
                    pl.BlockSpec((1, th, 1), lambda b, h: (b, h, 0)),
                    pl.BlockSpec((1, 1, K), lambda b, h: (0, 0, 0)),
                    pl.BlockSpec((1, 1, K), lambda b, h: (0, 0, 0)),
                    pl.BlockSpec((1, 1, K), lambda b, h: (b, 0, 0)),
                ],
                out_specs=pl.BlockSpec((1, th, K), lambda b, h: (b, h, 0)),
            ),
            compiler_params=compiler_params,
            cost_estimate=pl.CostEstimate(
                flops=3 * B * H * K,
                transcendentals=B * H * K,
                bytes_accessed=out_bytes + 4 * (B * H + 2 * K + B * K)),
        )(pos_x.reshape(B, H, 1), freq_lane, phase_lane, row_y)
        # Contiguous metadata-only reshape back to the module's output layout.
        return out_flat.reshape(B, H, W, two_c)

    # ---- Wide path (2C % 128 == 0): precompute tiny padded halves, broadcast-add, one full-width store. ----
    emb_x_pad = jnp.concatenate(
        [_get_emb(pos_x[:, :, None] * inv_freq[None, None, :]),
         jnp.zeros((B, H, C), jnp.float32)], axis=-1)                           # (B, H, 2C)
    emb_y_pad = jnp.concatenate(
        [jnp.zeros((B, W, C), jnp.float32),
         _get_emb(pos_y[:, :, None] * inv_freq[None, None, :])], axis=-1)       # (B, W, 2C)

    return pl.pallas_call(
        _pe2d_wide_kernel,
        out_shape=jax.ShapeDtypeStruct((B, H, W, two_c), out_dtype),
        grid_spec=pltpu.PrefetchScalarGridSpec(
            num_scalar_prefetch=0,
            grid=grid,
            in_specs=[
                pl.BlockSpec((1, th, two_c), lambda b, h: (b, h, 0)),
                pl.BlockSpec((1, W, two_c), lambda b, h: (b, 0, 0)),
            ],
            out_specs=pl.BlockSpec((1, th, W, two_c), lambda b, h: (b, h, 0, 0)),
        ),
        compiler_params=compiler_params,
        cost_estimate=pl.CostEstimate(
            flops=B * H * W * two_c,
            transcendentals=0,
            bytes_accessed=out_bytes + 4 * (B * H * two_c + B * W * two_c)),
    )(emb_x_pad, emb_y_pad)


def _reference_forward(coords: jax.Array, org_channels: int) -> jax.Array:
    """Pure-JAX transcription of the PyTorch forward (for verification)."""
    B, _, H, W = coords.shape
    C = int(math.ceil(org_channels / 4) * 2)
    inv_freq = 1.0 / (10000.0 ** (jnp.arange(0, C, 2, dtype=jnp.float32) / C))
    pos_x = coords[:, 0, 0, :].astype(jnp.float32)
    pos_y = coords[:, 1, :, 0].astype(jnp.float32)
    sin_inp_x = jnp.einsum("bi,j->bij", pos_x, inv_freq)
    sin_inp_y = jnp.einsum("bi,j->bij", pos_y, inv_freq)
    emb_x = _get_emb(sin_inp_x)[:, :, None, :]   # (B, W, 1, C)
    emb_y = _get_emb(sin_inp_y)[:, None, :, :]   # (B, 1, H, C)
    emb = jnp.zeros((B, H, W, 2 * C), coords.dtype)
    emb = emb.at[:, :, :, :C].set(jnp.broadcast_to(emb_x, (B, H, W, C)).astype(coords.dtype))
    emb = emb.at[:, :, :, C:].set(jnp.broadcast_to(emb_y, (B, H, W, C)).astype(coords.dtype))
    return emb


if __name__ == "__main__":
    key = jax.random.PRNGKey(0)
    B, NC, H, W = 2, 2, 16, 16                  # coords: (batch, num_coords, height, width)
    coords = jax.random.normal(key, (B, NC, H, W), dtype=jnp.float32)

    # Narrow-channel config (org_channels=8 -> 2C=8): lane-dense flattened-store path.
    out_a = jax.block_until_ready(positional_encoding_2d(coords, 8))
    ref_a = _reference_forward(coords, 8)
    assert out_a.shape == ref_a.shape and out_a.dtype == ref_a.dtype
    assert jnp.allclose(out_a, ref_a, atol=1e-5, rtol=1e-5)

    # Mid-range config (org_channels=64 -> 2C=64): previously masked 4-D stores,
    # now also lane-dense flat path.  Explicit tiling exercises the (B, H//TH) grid.
    out_m = jax.block_until_ready(positional_encoding_2d(coords, 64, tile_rows=8))
    ref_m = _reference_forward(coords, 64)
    assert out_m.shape == ref_m.shape and out_m.dtype == ref_m.dtype
    assert jnp.allclose(out_m, ref_m, atol=1e-5, rtol=1e-5)

    # Wide-channel config (org_channels=256 -> 2C=256): single full-width-store path.
    out_b = jax.block_until_ready(positional_encoding_2d(coords, 256))
    ref_b = _reference_forward(coords, 256)
    assert out_b.shape == ref_b.shape and out_b.dtype == ref_b.dtype
    assert jnp.allclose(out_b, ref_b, atol=1e-5, rtol=1e-5)

    out_b2 = jax.block_until_ready(positional_encoding_2d(coords, 256, tile_rows=8))
    assert jnp.allclose(out_b2, ref_b, atol=1e-5, rtol=1e-5)

    print("KERNEL_OK")
</pallas_src>

<mosaic_0001>
module attributes {stable_mosaic.version = 11 : i64} {
  func.func @_pe2d_flat_kernel(%arg0: i32, %arg1: i32, %arg2: memref<1x16x1xf32, #tpu.memory_space<vmem>>, %arg3: memref<1x1x128xf32, #tpu.memory_space<vmem>>, %arg4: memref<1x1x128xf32, #tpu.memory_space<vmem>>, %arg5: memref<1x1x128xf32, #tpu.memory_space<vmem>>, %arg6: memref<1x16x128xf32, #tpu.memory_space<vmem>>) attributes {dimension_semantics = [#tpu.dimension_semantics<parallel>, #tpu.dimension_semantics<parallel>], iteration_bounds = array<i64: 2, 1>, scalar_prefetch = 0 : i64, scratch_operands = 0 : i64, tpu.core_type = #tpu.core_type<tc>, window_params = [{transform_indices = @transform_0, window_bounds = array<i64: 1, 16, 1>}, {pipeline_mode = #tpu.pipeline_mode<synchronous>, transform_indices = @transform_1, window_bounds = array<i64: 1, 1, 128>}, {pipeline_mode = #tpu.pipeline_mode<synchronous>, transform_indices = @transform_2, window_bounds = array<i64: 1, 1, 128>}, {transform_indices = @transform_3, window_bounds = array<i64: 1, 1, 128>}, {transform_indices = @transform_4, window_bounds = array<i64: 1, 16, 128>}]} {
    %c0 = arith.constant 0 : index
    %c0_0 = arith.constant 0 : index
    %c0_1 = arith.constant 0 : index
    %0 = vector.load %arg2[%c0, %c0_0, %c0_1] : memref<1x16x1xf32, #tpu.memory_space<vmem>>, vector<1x16x1xf32>
    %1 = vector.shape_cast %0 : vector<1x16x1xf32> to vector<16x1xf32>
    %c0_2 = arith.constant 0 : index
    %c0_3 = arith.constant 0 : index
    %c0_4 = arith.constant 0 : index
    %2 = vector.load %arg3[%c0_2, %c0_3, %c0_4] : memref<1x1x128xf32, #tpu.memory_space<vmem>>, vector<1x1x128xf32>
    %3 = vector.shape_cast %2 : vector<1x1x128xf32> to vector<1x128xf32>
    %4 = vector.broadcast %1 : vector<16x1xf32> to vector<16x128xf32>
    %5 = vector.broadcast %3 : vector<1x128xf32> to vector<16x128xf32>
    %6 = arith.mulf %4, %5 : vector<16x128xf32>
    %c0_5 = arith.constant 0 : index
    %c0_6 = arith.constant 0 : index
    %c0_7 = arith.constant 0 : index
    %7 = vector.load %arg4[%c0_5, %c0_6, %c0_7] : memref<1x1x128xf32, #tpu.memory_space<vmem>>, vector<1x1x128xf32>
    %8 = vector.shape_cast %7 : vector<1x1x128xf32> to vector<1x128xf32>
    %9 = vector.broadcast %8 : vector<1x128xf32> to vector<16x128xf32>
    %10 = arith.addf %6, %9 : vector<16x128xf32>
    %11 = math.sin %10 : vector<16x128xf32>
    %c0_8 = arith.constant 0 : index
    %c0_9 = arith.constant 0 : index
    %c0_10 = arith.constant 0 : index
    %12 = vector.load %arg5[%c0_8, %c0_9, %c0_10] : memref<1x1x128xf32, #tpu.memory_space<vmem>>, vector<1x1x128xf32>
    %13 = vector.shape_cast %12 : vector<1x1x128xf32> to vector<1x128xf32>
    %14 = vector.broadcast %13 : vector<1x128xf32> to vector<16x128xf32>
    %15 = arith.addf %11, %14 : vector<16x128xf32>
    %c0_11 = arith.constant 0 : index
    %c0_12 = arith.constant 0 : index
    %c0_13 = arith.constant 0 : index
    %16 = vector.load %arg6[%c0_11, %c0_12, %c0_13] : memref<1x16x128xf32, #tpu.memory_space<vmem>>, vector<1x16x128xf32>
    %17 = vector.shape_cast %16 : vector<1x16x128xf32> to vector<16x128xf32>
    %18 = vector.shape_cast %15 : vector<16x128xf32> to vector<1x16x128xf32>
    tpu.vector_store %arg6[%c0_11, %c0_12, %c0_13], %18 {strides = array<i32>} : memref<1x16x128xf32, #tpu.memory_space<vmem>>, vector<1x16x128xf32>,
    return
  }
  func.func @transform_0(%arg0: i32, %arg1: i32) -> (i32, i32, i32) {
    %c0_i32 = arith.constant 0 : i32
    %c0_i32_0 = arith.constant 0 : i32
    return %arg0, %arg1, %c0_i32 : i32, i32, i32
  }
  func.func @transform_1(%arg0: i32, %arg1: i32) -> (i32, i32, i32) {
    %c0_i32 = arith.constant 0 : i32
    %c0_i32_0 = arith.constant 0 : i32
    %c0_i32_1 = arith.constant 0 : i32
    %c0_i32_2 = arith.constant 0 : i32
    return %c0_i32, %c0_i32_0, %c0_i32_1 : i32, i32, i32
  }
  func.func @transform_2(%arg0: i32, %arg1: i32) -> (i32, i32, i32) {
    %c0_i32 = arith.constant 0 : i32
    %c0_i32_0 = arith.constant 0 : i32
    %c0_i32_1 = arith.constant 0 : i32
    %c0_i32_2 = arith.constant 0 : i32
    return %c0_i32, %c0_i32_0, %c0_i32_1 : i32, i32, i32
  }
  func.func @transform_3(%arg0: i32, %arg1: i32) -> (i32, i32, i32) {
    %c0_i32 = arith.constant 0 : i32
    %c0_i32_0 = arith.constant 0 : i32
    %c0_i32_1 = arith.constant 0 : i32
    return %arg0, %c0_i32, %c0_i32_0 : i32, i32, i32
  }
  func.func @transform_4(%arg0: i32, %arg1: i32) -> (i32, i32, i32) {
    %c0_i32 = arith.constant 0 : i32
    %c0_i32_0 = arith.constant 0 : i32
    return %arg0, %arg1, %c0_i32 : i32, i32, i32
  }
}

</mosaic_0001>

<llo_original>
// kernel: tpu_custom_call.1
$region0: #{tpu_custom_call.1}
  #allocation0 [shape = 'u32[]', space=smem, size = 0x4, offset = 0x4, fixed_abs, tag = 'smem constant byte address 0x4 - core index']
  #allocation1 [shape = 'u32[144,128]{1,0:T(1,128)}', space=vmem, size = 0x12000, scoped, tag = 'internal scratch']
  %s0 = inlined_call_operand.vmem [shape: f32[2,16,1], index: 0, kind: input, shape index: {}]
  %s1 = inlined_call_operand.vmem [shape: f32[1,1,128], index: 1, kind: input, shape index: {}]
  %s2 = inlined_call_operand.vmem [shape: f32[1,1,128], index: 2, kind: input, shape index: {}]
  %s3 = inlined_call_operand.vmem [shape: f32[2,1,128], index: 3, kind: input, shape index: {}]
  %s4 = inlined_call_operand.hbm [shape: f32[2,16,128], index: 4, kind: output, shape index: {}]
  %s5 = sld [smem:[#allocation0]]
  $region49: #{tpu_custom_call.1} parent=0
    _
  %s7 = ssub.s32 1, %s5
  %s8 = scalar_select 0, %s7, %s5
  $region1: #{tpu_custom_call.1} parent=0
    #allocation2 [shape = 'u8[16384]{0}', space=vmem, size = 0x4000, scoped, tag = 'output window, operand 0']
    #allocation3 [shape = 's32[2]{0}', space=sflag, size = 0x8, scoped, tag = 'scoped memory for tpu_custom_call.1']
    %9 = vsyncpa [#allocation3], 0
    %s10 = scalar_lea.sflag [#allocation3], 1
    %11 = vsyncpa %s10, 0
    loop: start=0, step=1, limit=4
    $region2: #{tpu_custom_call.1} parent=1 // loop_pre_header
      _
    $region3: #{tpu_custom_call.1} parent=1 // loop_header
      %s13 = sphi 0, %s17
      %p14 = scmp.ge.s32.totalorder %s13, 4
      %s20 = sphi 0, %s32
      %s21 = sphi 0, %s28
      %s22 = sphi 0, %s20
      %s23 = sphi 0, %s21
      %s24 = sphi 0, %s22
      %s25 = sphi 0, %s23
      %s37 = sphi 0, %s39
      %s40 = sphi 0, %s37
      %s41 = sphi 0, %s40
      %s57 = sphi 0, %s41
      %s61 = sphi 0, %s61
      %s63 = sphi 0, %s61
      %s64 = sphi 0, %s63
      %s78 = sphi 0, %s64
      %s82 = sphi 0, %s82
      %s84 = sphi 0, %s82
      %s85 = sphi 0, %s84
      %s99 = sphi 0, %s85
      %s105 = sphi 0, %s107
      %s108 = sphi 0, %s105
      %s109 = sphi 0, %s108
      %s125 = sphi 0, %s109
      %s133 = sphi 0, %s135
      %s136 = sphi 0, %s133
      %s137 = sphi 0, %s136
      %s153 = sphi 0, %s137
    $region4: #{tpu_custom_call.1} parent=1 // loop_header_branch
      %16 = sbr.rel (%p14) target = $region8
    $region5: #{tpu_custom_call.1} parent=1 // loop_body
      %s18 = ssub.s32 %s13, 1
      %s19 = ssub.s32 %s13, 2
      %s26 = sadd.s32 1, %s21
      %p27 = scmp.ge.s32.totalorder %s26, 1
      %s28 = scalar_select %p27, 0, %s26
      %s29 = sadd.s32 1, %s20
      %s30 = scalar_select %p27, %s29, %s20
      %p31 = scmp.ge.s32.totalorder %s30, 2
      %s32 = scalar_select %p31, 0, %s30
      %s33 = ssub.s32 %s20, %s32
      %s34 = ssub.s32 %s21, %s28
      %s35 = sor.u32 %s33, %s34
      %p36 = scmp.eq.s32.totalorder %s35, 0
      %s38 = sadd.s32 %s37, 1
      %s39 = scalar_select %p36, %s37, %s38
      %p42 = pneg %p36
      %p43 = scmp.eq.s32.totalorder %s13, 1
      %p44 = por %p42, %p43
      %p45 = scmp.ne.s32.totalorder %s37, %s40
      %p46 = scmp.eq.s32.totalorder %s13, 0
      %p47 = por %p45, %p46
      %p48 = scmp.ne.s32.totalorder %s37, %s40
      %p49 = scmp.eq.s32.totalorder %s18, 1
      %p50 = por %p48, %p49
      %p51 = scmp.ne.s32.totalorder %s40, %s41
      %p52 = scmp.eq.s32.totalorder %s18, 0
      %p53 = por %p51, %p52
      %p54 = scmp.ne.s32.totalorder %s40, %s41
      %p55 = scmp.eq.s32.totalorder %s19, 1
      %p56 = por %p54, %p55
      %p58 = scmp.ne.s32.totalorder %s41, %s57
      %p59 = scmp.eq.s32.totalorder %s19, 0
      %p60 = por %p58, %p59
      %s62 = sadd.s32 %s61, 1
      %p65 = scmp.eq.s32.totalorder %s13, 1
      %p66 = scmp.ne.s32.totalorder %s61, %s63
      %p67 = scmp.eq.s32.totalorder %s13, 0
      %p68 = por %p66, %p67
      %p69 = scmp.ne.s32.totalorder %s61, %s63
      %p70 = scmp.eq.s32.totalorder %s18, 1
      %p71 = por %p69, %p70
      %p72 = scmp.ne.s32.totalorder %s63, %s64
      %p73 = scmp.eq.s32.totalorder %s18, 0
      %p74 = por %p72, %p73
      %p75 = scmp.ne.s32.totalorder %s63, %s64
      %p76 = scmp.eq.s32.totalorder %s19, 1
      %p77 = por %p75, %p76
      %p79 = scmp.ne.s32.totalorder %s64, %s78
      %p80 = scmp.eq.s32.totalorder %s19, 0
      %p81 = por %p79, %p80
      %s83 = sadd.s32 %s82, 1
      %p86 = scmp.eq.s32.totalorder %s13, 1
      %p87 = scmp.ne.s32.totalorder %s82, %s84
      %p88 = scmp.eq.s32.totalorder %s13, 0
      %p89 = por %p87, %p88
      %p90 = scmp.ne.s32.totalorder %s82, %s84
      %p91 = scmp.eq.s32.totalorder %s18, 1
      %p92 = por %p90, %p91
      %p93 = scmp.ne.s32.totalorder %s84, %s85
      %p94 = scmp.eq.s32.totalorder %s18, 0
      %p95 = por %p93, %p94
      %p96 = scmp.ne.s32.totalorder %s84, %s85
      %p97 = scmp.eq.s32.totalorder %s19, 1
      %p98 = por %p96, %p97
      %p100 = scmp.ne.s32.totalorder %s85, %s99
      %p101 = scmp.eq.s32.totalorder %s19, 0
      %p102 = por %p100, %p101
      %s103 = ssub.s32 %s20, %s32
      %p104 = scmp.eq.s32.totalorder %s103, 0
      %s106 = sadd.s32 %s105, 1
      %s107 = scalar_select %p104, %s105, %s106
      %p110 = pneg %p104
      %p111 = scmp.eq.s32.totalorder %s13, 1
      %p112 = por %p110, %p111
      %p113 = scmp.ne.s32.totalorder %s105, %s108
      %p114 = scmp.eq.s32.totalorder %s13, 0
      %p115 = por %p113, %p114
      %p116 = scmp.ne.s32.totalorder %s105, %s108
      %p117 = scmp.eq.s32.totalorder %s18, 1
      %p118 = por %p116, %p117
      %p119 = scmp.ne.s32.totalorder %s108, %s109
      %p120 = scmp.eq.s32.totalorder %s18, 0
      %p121 = por %p119, %p120
      %p122 = scmp.ne.s32.totalorder %s108, %s109
      %p123 = scmp.eq.s32.totalorder %s19, 1
      %p124 = por %p122, %p123
      %p126 = scmp.ne.s32.totalorder %s109, %s125
      %p127 = scmp.eq.s32.totalorder %s19, 0
      %p128 = por %p126, %p127
      %s129 = ssub.s32 %s20, %s32
      %s130 = ssub.s32 %s21, %s28
      %s131 = sor.u32 %s129, %s130
      %p132 = scmp.eq.s32.totalorder %s131, 0
      %s134 = sadd.s32 %s133, 1
      %s135 = scalar_select %p132, %s133, %s134
      %p138 = pneg %p132
      %p139 = scmp.eq.s32.totalorder %s13, 1
      %p140 = por %p138, %p139
      %p141 = scmp.ne.s32.totalorder %s133, %s136
      %p142 = scmp.eq.s32.totalorder %s13, 0
      %p143 = por %p141, %p142
      %p144 = scmp.ne.s32.totalorder %s133, %s136
      %p145 = scmp.eq.s32.totalorder %s18, 1
      %p146 = por %p144, %p145
      %p147 = scmp.ne.s32.totalorder %s136, %s137
      %p148 = scmp.eq.s32.totalorder %s18, 0
      %p149 = por %p147, %p148
      %p150 = scmp.ne.s32.totalorder %s136, %s137
      %p151 = scmp.eq.s32.totalorder %s19, 1
      %p152 = por %p150, %p151
      %p154 = scmp.ne.s32.totalorder %s137, %s153
      %p155 = scmp.eq.s32.totalorder %s19, 0
      %p156 = por %p154, %p155
      %p157 = scmp.le.s32.totalorder 1, %s13
      %p158 = scmp.lt.s32.totalorder %s13, 3
      %p159 = pnand %p157, %p158
      %p160 = pneg %p159
      // Predicated region
      $region9: #{tpu_custom_call.1} parent=5 // pred_check
        _
      $region10: #{tpu_custom_call.1} parent=5 // pred_check_branch
        %162 = sbr.rel (%p159) target = $region12
      $region11: #{tpu_custom_call.1} parent=5 // pred_region
        %s163 = ssub.s32 %s13, 1
        // Predicated region
        $region13: #{tpu_custom_call.1} parent=11 // pred_check
          %p164 = pneg %p74
        $region14: #{tpu_custom_call.1} parent=11 // pred_check_branch
          %166 = sbr.rel (%p164) target = $region16
        $region15: #{tpu_custom_call.1} parent=11 // pred_region
          _
        $region16: #{tpu_custom_call.1} parent=11 // pred_fallthru
          _
        // Predicated region
        $region17: #{tpu_custom_call.1} parent=11 // pred_check
          %p167 = pneg %p95
        $region18: #{tpu_custom_call.1} parent=11 // pred_check_branch
          %169 = sbr.rel (%p167) target = $region20
        $region19: #{tpu_custom_call.1} parent=11 // pred_region
          _
        $region20: #{tpu_custom_call.1} parent=11 // pred_fallthru
          _
      $region12: #{tpu_custom_call.1} parent=5 // pred_fallthru
        _
      %p170 = scmp.lt.s32.totalorder %s13, 2
      // Predicated region
      $region21: #{tpu_custom_call.1} parent=5 // pred_check
        %p171 = pneg %p170
      $region22: #{tpu_custom_call.1} parent=5 // pred_check_branch
        %173 = sbr.rel (%p171) target = $region24
      $region23: #{tpu_custom_call.1} parent=5 // pred_region
        // Predicated region
        $region25: #{tpu_custom_call.1} parent=23 // pred_check
          %p174 = pneg %p47
        $region26: #{tpu_custom_call.1} parent=23 // pred_check_branch
          %176 = sbr.rel (%p174) target = $region28
        $region27: #{tpu_custom_call.1} parent=23 // pred_region
          %s177 = smul.u32 2, %s21
          %p178 = scmp.lt.s32.totalorder %s20, 1
          %s179 = scalar_select %p178, %s20, 1
          %p180 = scmp.lt.s32.totalorder %s177, 1
          %s181 = scalar_select %p180, %s177, 1
          %s182 = smul.addr %s179, 2
          %s183 = sadd.s32 %s181, %s182
          %s184 = smul.addr %s183, 8
          %s185 = scalar_lea.vmem %s0, %s184
          %s186 = smul.u32 2, %s21
        $region28: #{tpu_custom_call.1} parent=23 // pred_fallthru
          _
        // Predicated region
        $region29: #{tpu_custom_call.1} parent=23 // pred_check
          %p187 = pneg %p115
        $region30: #{tpu_custom_call.1} parent=23 // pred_check_branch
          %189 = sbr.rel (%p187) target = $region32
        $region31: #{tpu_custom_call.1} parent=23 // pred_region
          %p190 = scmp.lt.s32.totalorder %s20, 1
          %s191 = scalar_select %p190, %s20, 1
          %s192 = scalar_lea.vmem %s3, %s191
        $region32: #{tpu_custom_call.1} parent=23 // pred_fallthru
          _
      $region24: #{tpu_custom_call.1} parent=5 // pred_fallthru
        _
      %p193 = scmp.le.s32.totalorder 1, %s13
      %p194 = scmp.lt.s32.totalorder %s13, 3
      %p195 = pnand %p193, %p194
      %p196 = pneg %p195
      // Predicated region
      $region33: #{tpu_custom_call.1} parent=5 // pred_check
        _
      $region34: #{tpu_custom_call.1} parent=5 // pred_check_branch
        %198 = sbr.rel (%p195) target = $region36
      $region35: #{tpu_custom_call.1} parent=5 // pred_region
        %s199 = ssub.s32 %s13, 1
        %s200 = smul.u32 2, %s23
        %p201 = scmp.lt.s32.totalorder %s22, 1
        %s202 = scalar_select %p201, %s22, 1
        %p203 = scmp.lt.s32.totalorder %s200, 1
        %s204 = scalar_select %p203, %s200, 1
        %s205 = smul.addr %s202, 2
        %s206 = sadd.s32 %s204, %s205
        %s207 = smul.addr %s206, 8
        %s208 = scalar_lea.vmem %s0, %s207
        %p209 = pneg %p53
        %p210 = pneg %p50
        %p211 = pneg %p74
        %p212 = pneg %p71
        %p213 = pneg %p95
        %p214 = pneg %p92
        %p215 = scmp.lt.s32.totalorder %s22, 1
        %s216 = scalar_select %p215, %s22, 1
        %s217 = scalar_lea.vmem %s3, %s216
        %p218 = pneg %p121
        %p219 = pneg %p118
        %p220 = pneg %p149
        %p221 = pneg %p146
        %s222 = sand.u32 %s136, 1
        %s223 = scalar_lea.sflag [#allocation3], %s222
        %s224 = sand.u32 %s136, 1
        %s225 = smul.addr %s224, 16
        %s226 = scalar_lea.vmem [#allocation2], %s225
        %s227 = smul.u32 2, %s23
        %p228 = scmp.lt.s32.totalorder %s22, 1
        %s229 = scalar_select %p228, %s22, 1
        %p230 = scmp.lt.s32.totalorder %s227, 1
        %s231 = scalar_select %p230, %s227, 1
        %s232 = smul.addr %s229, 2
        %s233 = sadd.s32 %s231, %s232
        %s234 = smul.addr %s233, 8
        %s235 = scalar_lea.vmem %s0, %s234
        %s236 = smul.u32 2, %s23
        %p237 = scmp.lt.s32.totalorder %s22, 1
        %s238 = scalar_select %p237, %s22, 1
        %s239 = scalar_lea.vmem %s3, %s238
        %s240 = smul.u32 2, %s23
        %v241 = vld [vmem:[%s235] sm:$0xff]
        %v242 = vld [vmem:[%s235 + $0x8] sm:$0xff]
        %v243 = vld [vmem:[%s1] sm:$0x1]
        %245 = vset.pattern.permute.xlu0 0
        %246 = vperm.xlu0 %245, %v241
        %v247 = vpop.permute.xlu0 %246
        %250 = vset.pattern.permute.xlu0 0
        %251 = vperm.xlu0 %250, %v242
        %v252 = vpop.permute.xlu0 %251
        %v255 = vlaneseq
        %v256 = vshrl.u32 %v255, 7
        %v257 = vsub.s32 0, %v256
        %v258 = vrot.slane %v243, %v257
        %v260 = vmul.f32 %v247, %v258
        %v261 = vmul.f32 %v252, %v258
        %v262 = vld [vmem:[%s2] sm:$0x1]
        %v264 = vlaneseq
        %v265 = vshrl.u32 %v264, 7
        %v266 = vsub.s32 0, %v265
        %v267 = vrot.slane %v262, %v266
        %v269 = vadd.f32 %v260, %v267
        %v270 = vadd.f32 %v261, %v267
        %v271 = vand.u32 2147483647, %v269
        %vm272 = vcmp.le.f32.partialorder %v271, 0.7853982
        %vm273 = vcmp.lt.s32.totalorder %v269, 0
        %v274 = vand.u32 %v269, 2139095040
        %v275 = vshrl.u32 %v274, 23
        %v276 = vsub.s32 %v275, 127
        %v277 = vand.u32 2147483647, %v269
        %v278 = vand.u32 %v277, 8388607
        %v279 = vor.u32 %v278, 8388608
        %v280 = vsub.s32 0, %v279
        %v281 = vadd.s32 %v276, 1
        %vm282 = vcmp.gt.s32.totalorder %v281, 0
        %v283 = vsel %vm282, %v281, 0
        %v284 = vshrl.u32 %v283, 5
        %v285 = vand.u32 %v283, 31
        %v286 = vsub.s32 32, %v285
        %v287 = vshrl.u32 683565275, %v286
        %v288 = vshll.u32 683565275, %v285
        %v289 = vshrl.u32 2475754826, %v286
        %v290 = vor.u32 %v288, %v289
        %v291 = vshll.u32 2475754826, %v285
        %v292 = vshrl.u32 2131351028, %v286
        %v293 = vor.u32 %v291, %v292
        %v294 = vshll.u32 2131351028, %v285
        %v295 = vshrl.u32 2102212464, %v286
        %v296 = vor.u32 %v294, %v295
        %v297 = vshll.u32 2102212464, %v285
        %v298 = vshrl.u32 920167782, %v286
        %v299 = vor.u32 %v297, %v298
        %v300 = vshll.u32 920167782, %v285
        %v301 = vshrl.u32 1326507024, %v286
        %v302 = vor.u32 %v300, %v301
        %vm303 = vcmp.lt.s32.totalorder %v284, 1
        %vm304 = vcmp.lt.s32.totalorder %v284, 2
        %vm305 = vcmp.lt.s32.totalorder %v284, 3
        %vm306 = vcmp.lt.s32.totalorder %v284, 4
        %v307 = vsel %vm303, %v287, %v290
        %v308 = vsel %vm306, %v296, 2102212464
        %v309 = vsel %vm305, %v293, %v308
        %v310 = vsel %vm304, %v307, %v309
        %v311 = vsel %vm303, %v290, %v293
        %v312 = vsel %vm306, %v299, 920167782
        %v313 = vsel %vm305, %v296, %v312
        %v314 = vsel %vm304, %v311, %v313
        %v315 = vsel %vm303, %v293, %v296
        %v316 = vsel %vm306, %v302, 1326507024
        %v317 = vsel %vm305, %v299, %v316
        %v318 = vsel %vm304, %v315, %v317
        %v319 = vshll.u32 %v279, 8
        %v320 = vmul.u32.u64.compose %v319, %v318
        %v321 = vextract.low.u32 %v320
        %v322 = vextract.high.u32 %v320
        %v323 = vmul.u32.u64.compose %v319, %v314
        %v324 = vextract.low.u32 %v323
        %v325 = vextract.high.u32 %v323
        %v326 = vmul.u32 %v319, %v310
        %v327 = vadd.s32 %v322, %v324
        %vm328 = vc.u32 %v322, %v324
        %v329 = vadd.s32 %v325, 1
        %v330 = vsel %vm328, %v329, %v325
        %v331 = vadd.s32 %v326, %v330
        %v332 = vadd.s32 %v331, 536870912
        %v333 = vshrl.u32 %v332, 30
        %v334 = vshll.u32 %v333, 30
        %v335 = vsub.s32 %v331, %v334
        %vm336 = vcmp.lt.s32.totalorder %v335, 0
        %v337 = vsub.s32 0, %v335
        %v338 = vsel %vm336, %v337, %v335
        %v339 = vclz %v338
        %v340 = vsub.s32 %v339, 2
        %vm341 = vcmp.gt.s32.totalorder 0, %v340
        %v342 = vsel %vm341, 0, %v340
        %v343 = vsub.s32 32, %v342
        %v344 = vshll.u32 %v335, %v342
        %v345 = vshrl.u32 %v327, %v343
        %v346 = vor.u32 %v344, %v345
        %v347 = vsub.s32 4294967266, %v342
        %v348 = vadd.s32 %v347, 127
        %v349 = vshll.u32 %v348, 23
        %v350 = vor.u32 4788187, %v349
        %v351 = vand.u32 2147483647, %v350
        %v353 = vcvt.s32.f32 %v346
        %v354 = vmul.f32 %v353, %v351
        %v355 = vxor.u32 %v354, 2147483648
        %v356 = vsel %vm273, %v355, %v354
        %v357 = vsub.s32 4, %v333
        %v358 = vsel %vm273, %v357, %v333
        %v359 = vsel %vm272, %v269, %v356
        %v360 = vsel %vm272, 0, %v358
        %v361 = vcosq.f32.pop %v359
        %v362 = vsinq.f32.pop %v359
        %vm363 = vweird.f32 %v269
        %v364 = vadd.s32 %v360, 3
        %v365 = vand.u32 %v364, 3
        %vm366 = vcmp.lt.s32.totalorder %v365, 2
        %vm367 = vcmp.eq.s32.totalorder %v365, 0
        %v368 = vxor.u32 %v362, 2147483648
        %v369 = vsel %vm367, %v361, %v368
        %vm370 = vcmp.eq.s32.totalorder %v365, 2
        %v371 = vxor.u32 %v361, 2147483648
        %v372 = vsel %vm370, %v371, %v362
        %v373 = vsel %vm366, %v369, %v372
        %v374 = vsel %vm363, nan, %v373
        %v375 = vand.u32 2147483647, %v270
        %vm376 = vcmp.le.f32.partialorder %v375, 0.7853982
        %vm377 = vcmp.lt.s32.totalorder %v270, 0
        %v378 = vand.u32 %v270, 2139095040
        %v379 = vshrl.u32 %v378, 23
        %v380 = vsub.s32 %v379, 127
        %v381 = vand.u32 2147483647, %v270
        %v382 = vand.u32 %v381, 8388607
        %v383 = vor.u32 %v382, 8388608
        %v384 = vsub.s32 0, %v383
        %v385 = vadd.s32 %v380, 1
        %vm386 = vcmp.gt.s32.totalorder %v385, 0
        %v387 = vsel %vm386, %v385, 0
        %v388 = vshrl.u32 %v387, 5
        %v389 = vand.u32 %v387, 31
        %v390 = vsub.s32 32, %v389
        %v391 = vshrl.u32 683565275, %v390
        %v392 = vshll.u32 683565275, %v389
        %v393 = vshrl.u32 2475754826, %v390
        %v394 = vor.u32 %v392, %v393
        %v395 = vshll.u32 2475754826, %v389
        %v396 = vshrl.u32 2131351028, %v390
        %v397 = vor.u32 %v395, %v396
        %v398 = vshll.u32 2131351028, %v389
        %v399 = vshrl.u32 2102212464, %v390
        %v400 = vor.u32 %v398, %v399
        %v401 = vshll.u32 2102212464, %v389
        %v402 = vshrl.u32 920167782, %v390
        %v403 = vor.u32 %v401, %v402
        %v404 = vshll.u32 920167782, %v389
        %v405 = vshrl.u32 1326507024, %v390
        %v406 = vor.u32 %v404, %v405
        %vm407 = vcmp.lt.s32.totalorder %v388, 1
        %vm408 = vcmp.lt.s32.totalorder %v388, 2
        %vm409 = vcmp.lt.s32.totalorder %v388, 3
        %vm410 = vcmp.lt.s32.totalorder %v388, 4
        %v411 = vsel %vm407, %v391, %v394
        %v412 = vsel %vm410, %v400, 2102212464
        %v413 = vsel %vm409, %v397, %v412
        %v414 = vsel %vm408, %v411, %v413
        %v415 = vsel %vm407, %v394, %v397
        %v416 = vsel %vm410, %v403, 920167782
        %v417 = vsel %vm409, %v400, %v416
        %v418 = vsel %vm408, %v415, %v417
        %v419 = vsel %vm407, %v397, %v400
        %v420 = vsel %vm410, %v406, 1326507024
        %v421 = vsel %vm409, %v403, %v420
        %v422 = vsel %vm408, %v419, %v421
        %v423 = vshll.u32 %v383, 8
        %v424 = vmul.u32.u64.compose %v423, %v422
        %v425 = vextract.low.u32 %v424
        %v426 = vextract.high.u32 %v424
        %v427 = vmul.u32.u64.compose %v423, %v418
        %v428 = vextract.low.u32 %v427
        %v429 = vextract.high.u32 %v427
        %v430 = vmul.u32 %v423, %v414
        %v431 = vadd.s32 %v426, %v428
        %vm432 = vc.u32 %v426, %v428
        %v433 = vadd.s32 %v429, 1
        %v434 = vsel %vm432, %v433, %v429
        %v435 = vadd.s32 %v430, %v434
        %v436 = vadd.s32 %v435, 536870912
        %v437 = vshrl.u32 %v436, 30
        %v438 = vshll.u32 %v437, 30
        %v439 = vsub.s32 %v435, %v438
        %vm440 = vcmp.lt.s32.totalorder %v439, 0
        %v441 = vsub.s32 0, %v439
        %v442 = vsel %vm440, %v441, %v439
        %v443 = vclz %v442
        %v444 = vsub.s32 %v443, 2
        %vm445 = vcmp.gt.s32.totalorder 0, %v444
        %v446 = vsel %vm445, 0, %v444
        %v447 = vsub.s32 32, %v446
        %v448 = vshll.u32 %v439, %v446
        %v449 = vshrl.u32 %v431, %v447
        %v450 = vor.u32 %v448, %v449
        %v451 = vsub.s32 4294967266, %v446
        %v452 = vadd.s32 %v451, 127
        %v453 = vshll.u32 %v452, 23
        %v454 = vor.u32 4788187, %v453
        %v455 = vand.u32 2147483647, %v454
        %v457 = vcvt.s32.f32 %v450
        %v458 = vmul.f32 %v457, %v455
        %v459 = vxor.u32 %v458, 2147483648
        %v460 = vsel %vm377, %v459, %v458
        %v461 = vsub.s32 4, %v437
        %v462 = vsel %vm377, %v461, %v437
        %v463 = vsel %vm376, %v270, %v460
        %v464 = vsel %vm376, 0, %v462
        %v465 = vcosq.f32.pop %v463
        %v466 = vsinq.f32.pop %v463
        %vm467 = vweird.f32 %v270
        %v468 = vadd.s32 %v464, 3
        %v469 = vand.u32 %v468, 3
        %vm470 = vcmp.lt.s32.totalorder %v469, 2
        %vm471 = vcmp.eq.s32.totalorder %v469, 0
        %v472 = vxor.u32 %v466, 2147483648
        %v473 = vsel %vm471, %v465, %v472
        %vm474 = vcmp.eq.s32.totalorder %v469, 2
        %v475 = vxor.u32 %v465, 2147483648
        %v476 = vsel %vm474, %v475, %v466
        %v477 = vsel %vm470, %v473, %v476
        %v478 = vsel %vm467, nan, %v477
        %v479 = vld [vmem:[%s239] sm:$0x1]
        %v481 = vlaneseq
        %v482 = vshrl.u32 %v481, 7
        %v483 = vsub.s32 0, %v482
        %v484 = vrot.slane %v479, %v483
        %v486 = vadd.f32 %v374, %v484
        %v487 = vadd.f32 %v478, %v484
        %488 = vst [vmem:[%s226] sm:$0xff] %v486
        %489 = vst [vmem:[%s226 + $0x8] sm:$0xff] %v487
        %s490 = sand.u32 %s136, 1
        %s491 = scalar_lea.sflag [#allocation3], %s490
        %s492 = sand.u32 %s136, 1
        %s493 = smul.addr %s492, 16
        %s494 = scalar_lea.vmem [#allocation2], %s493
        // Predicated region
        $region37: #{tpu_custom_call.1} parent=35 // pred_check
          %p495 = pneg %p146
        $region38: #{tpu_custom_call.1} parent=35 // pred_check_branch
          %497 = sbr.rel (%p495) target = $region40
        $region39: #{tpu_custom_call.1} parent=35 // pred_region
          %s498 = smul.u32 2, %s23
          %s500 = ssub.s32 256, 256
          %501 = vsyncadd %s491, %s500
          %s502 = smul.addr %s22, 2
          %s503 = sadd.s32 %s498, %s502
          %s504 = smul.addr %s503, 128
          %s505 = scalar_lea.hbm %s4, %s504
          %s506 = sshll.u32 %s494, 4
          %s507 = int_to_ptr.vmem [resolvable:$true] %s506
          %512 = dma.vmem_to_hbm [thread:$0]  %s507, 256, %s505, %s491, 128, 128, 8
        $region40: #{tpu_custom_call.1} parent=35 // pred_fallthru
          _
      $region36: #{tpu_custom_call.1} parent=5 // pred_fallthru
        _
      %p513 = scmp.le.s32.totalorder 2, %s13
      // Predicated region
      $region41: #{tpu_custom_call.1} parent=5 // pred_check
        %p514 = pneg %p513
      $region42: #{tpu_custom_call.1} parent=5 // pred_check_branch
        %516 = sbr.rel (%p514) target = $region44
      $region43: #{tpu_custom_call.1} parent=5 // pred_region
        %s517 = ssub.s32 %s13, 2
        // Predicated region
        $region45: #{tpu_custom_call.1} parent=43 // pred_check
          %p518 = pneg %p152
        $region46: #{tpu_custom_call.1} parent=43 // pred_check_branch
          %520 = sbr.rel (%p518) target = $region48
        $region47: #{tpu_custom_call.1} parent=43 // pred_region
          %s521 = sand.u32 %s137, 1
          %s522 = scalar_lea.sflag [#allocation3], %s521
          %s523 = sand.u32 %s137, 1
          %s524 = smul.addr %s523, 16
          %s525 = scalar_lea.vmem [#allocation2], %s524
          %526 = dma.done %s522, 256
        $region48: #{tpu_custom_call.1} parent=43 // pred_fallthru
          _
      $region44: #{tpu_custom_call.1} parent=5 // pred_fallthru
        _
    $region6: #{tpu_custom_call.1} parent=1 // loop_footer
      %s17 = sadd.s32 1, %s13
    $region7: #{tpu_custom_call.1} parent=1 // loop_footer_branch
      %12 = sbr.rel target = $region3
    $region8: #{tpu_custom_call.1} parent=1 // loop_exit
      _
    %527 = vsyncpa [#allocation3], 1
    %s528 = scalar_lea.sflag [#allocation3], 1
    %529 = vsyncpa %s528, 1

</llo_original>
